<compile_context>
chip_gen: v7x
topology: tpu7x:2x2x1
jax: 0.10.0
libtpu: 0.0.40
codegen_flags: <defaults>
</compile_context>

<pallas_src>
import functools

import jax
import jax.numpy as jnp
from jax.experimental import pallas as pl
from jax.experimental.pallas import tpu as pltpu


def _round_up(v, m):
    return ((v + m - 1) // m) * m


def _continuous_kernel_body(x_ref, yT_ref, nx2_ref, ny2_ref, o_ref, *, bf16_exp):
    # x_ref  : (TM, F)  x tile, pre-scaled by 1/bandwidth          (MXU LHS)
    # yT_ref : (F, TN)  (y / bandwidth)^T tile                     (MXU RHS layout)
    # nx2_ref: (TM, 1)  precomputed -0.5 * ||x_i / bw||^2
    # ny2_ref: (1, TN)  precomputed -0.5 * ||y_j / bw||^2
    # o_ref  : (TM, TN) similarity tile
    xy = jnp.dot(x_ref[...], yT_ref[...],
                 preferred_element_type=jnp.float32,
                 precision=jax.lax.Precision.HIGHEST)            # MXU, K = F (tiny)
    # exp argument = x.y - 0.5||x||^2 - 0.5||y||^2 = -0.5 ||x - y||^2  (<= 0)
    arg = jnp.minimum(xy + nx2_ref[...] + ny2_ref[...], 0.0)
    if bf16_exp:
        arg = arg.astype(jnp.bfloat16)     # packed bf16 EUP on v6e/v7x
    o_ref[...] = jnp.exp(arg).astype(o_ref.dtype)


@functools.partial(
    jax.jit,
    static_argnames=("tile_m", "tile_n", "out_dtype", "bf16_exp", "bw_eps"),
)
def _forward_impl(x, y, bandwidth, *, tile_m, tile_n, out_dtype, bf16_exp, bw_eps):
    N, F = x.shape
    M, Fy = y.shape
    assert F == Fy == bandwidth.shape[-1]

    # ---- one-time preprocessing (fused under jit, hoisted out of the grid) --
    inv_bw = 1.0 / jnp.maximum(bandwidth.astype(jnp.float32), bw_eps)     # (F,)
    xs = x.astype(jnp.float32) * inv_bw[None, :]                          # (N, F)
    ys_fm = inv_bw[:, None] * y.astype(jnp.float32).T                     # (F, M)
    nx2 = -0.5 * jnp.sum(xs * xs, axis=-1, keepdims=True)                 # (N, 1)
    ny2 = -0.5 * jnp.sum(ys_fm * ys_fm, axis=0, keepdims=True)            # (1, M)

    # ---- tile selection: lane-dense, (8,128)-aligned, no array padding ------
    tile_m = _round_up(min(tile_m, _round_up(N, 8)), 8)
    tile_n = _round_up(min(tile_n, _round_up(M, 128)), 128)
    # Keep >= 2 output blocks when possible so the parallel grid can split
    # across both v7x TensorCores.
    if pl.cdiv(N, tile_m) * pl.cdiv(M, tile_n) < 2:
        if tile_m > 8:
            tile_m = _round_up(max(tile_m // 2, 8), 8)
        elif tile_n > 128:
            tile_n = _round_up(max(tile_n // 2, 128), 128)

    grid = (pl.cdiv(N, tile_m), pl.cdiv(M, tile_n))

    # VMEM budget: double-buffered output slab + (small) double-buffered
    # inputs + headroom; capped for the v7x 64 MiB-per-core VMEM.
    out_bytes = tile_m * tile_n * jnp.dtype(out_dtype).itemsize
    in_bytes = (tile_m * F + F * tile_n + tile_m * 128 + 8 * tile_n) * 4
    vmem_limit = max(16 << 20, min(48 << 20, 2 * (out_bytes + in_bytes) + (4 << 20)))

    kernel = functools.partial(_continuous_kernel_body, bf16_exp=bf16_exp)

    return pl.pallas_call(
        kernel,
        out_shape=jax.ShapeDtypeStruct((N, M), out_dtype),
        grid_spec=pltpu.PrefetchScalarGridSpec(
            num_scalar_prefetch=0,
            grid=grid,
            in_specs=[
                pl.BlockSpec((tile_m, F), lambda i, j: (i, 0)),   # x / bw
                pl.BlockSpec((F, tile_n), lambda i, j: (0, j)),   # (y / bw)^T
                pl.BlockSpec((tile_m, 1), lambda i, j: (i, 0)),   # -0.5||x||^2
                pl.BlockSpec((1, tile_n), lambda i, j: (0, j)),   # -0.5||y||^2
            ],
            out_specs=pl.BlockSpec((tile_m, tile_n), lambda i, j: (i, j)),
        ),
        compiler_params=pltpu.CompilerParams(
            dimension_semantics=("parallel", "parallel"),
            vmem_limit_bytes=int(vmem_limit),
        ),
    )(xs, ys_fm, nx2, ny2)


def _auto_bf16_exp(out_dtype):
    """Packed-bf16 exp only when writing bf16 on a chip with a bf16 EUP."""
    if jnp.dtype(out_dtype) != jnp.dtype(jnp.bfloat16):
        return False
    try:
        kind = jax.devices()[0].device_kind.lower()
    except Exception:
        return False
    return ("v6" in kind) or ("v7" in kind)


def continuous_kernel_forward(x, y, bandwidth, *, tile_m=512, tile_n=4096,
                              out_dtype=jnp.float32, bf16_exp=None, bw_eps=1e-6):
    """Pairwise Gaussian similarity K (N, M): K[i,j] = exp(-0.5||(x_i - y_j)/bw||^2).

    out_dtype=jnp.bfloat16 is recommended on v5e/v6e (halves the dominant
    NxM HBM writeback); f32 is the default for strict accuracy.
    """
    if bf16_exp is None:
        bf16_exp = _auto_bf16_exp(out_dtype)
    return _forward_impl(x, y, bandwidth, tile_m=int(tile_m), tile_n=int(tile_n),
                         out_dtype=out_dtype, bf16_exp=bool(bf16_exp),
                         bw_eps=float(bw_eps))


def silverman_bandwidth(train_data):
    """0.9 * std(train_data, dim=0, unbiased) * n ** (-0.2), matching torch.std."""
    n = train_data.shape[0]
    std = jnp.std(train_data, axis=0, ddof=1)   # torch.std default is unbiased
    # TODO(synk): with a single training row (n == 1) torch.std / ddof=1 yields NaN,
    #             matching the reference module's behavior.
    return 0.9 * std * (n ** (-0.2))


def feature_importance(nb_features, dtype=jnp.float32):
    return jnp.ones((nb_features,), dtype=dtype)


def _reference(x, y, bandwidth):
    d = (x[:, None, :] - y[None, :, :]) / bandwidth[None, None, :]
    return jnp.exp(-0.5 * jnp.sum(d * d, axis=-1))


if __name__ == "__main__":
    key = jax.random.PRNGKey(0)
    k_train, k_x, k_y = jax.random.split(key, 3)

    F = 8           # number of continuous features
    N_TRAIN = 32    # rows used to derive the Silverman bandwidth
    N, M = 120, 200  # deliberately non-aligned to exercise edge-block masking

    train_data = jax.random.normal(k_train, (N_TRAIN, F), dtype=jnp.float32) * 2.0 + 1.0
    bandwidth = silverman_bandwidth(train_data)        # nn.Parameter init value
    _ = feature_importance(F)                          # property equivalent

    x = jax.random.normal(k_x, (N, F), dtype=jnp.float32)
    y = jax.random.normal(k_y, (M, F), dtype=jnp.float32)

    ref = _reference(x, y, bandwidth)

    # f32 output, default (large) tiles; ragged N/M handled by masked edge blocks.
    out = continuous_kernel_forward(x, y, bandwidth)
    out = jax.block_until_ready(out)
    assert out.shape == (N, M)
    assert jnp.allclose(out, ref, atol=1e-4, rtol=1e-4), float(jnp.max(jnp.abs(out - ref)))

    # bf16 writeback path with small tiles (multi-tile grid, packed bf16 exp on v6e/v7x).
    out_bf16 = continuous_kernel_forward(x, y, bandwidth, tile_m=64, tile_n=128,
                                         out_dtype=jnp.bfloat16)
    out_bf16 = jax.block_until_ready(out_bf16)
    assert out_bf16.shape == (N, M)
    max_err = float(jnp.max(jnp.abs(out_bf16.astype(jnp.float32) - ref)))
    assert max_err < 2e-2, max_err

    print("KERNEL_OK")
</pallas_src>

<mosaic_0001>
module attributes {stable_mosaic.version = 11 : i64} {
  func.func @_continuous_kernel_body(%arg0: i32, %arg1: i32, %arg2: memref<64x8xf32, #tpu.memory_space<vmem>>, %arg3: memref<8x256xf32, #tpu.memory_space<vmem>>, %arg4: memref<64x1xf32, #tpu.memory_space<vmem>>, %arg5: memref<1x256xf32, #tpu.memory_space<vmem>>, %arg6: memref<64x256xf32, #tpu.memory_space<vmem>>) attributes {dimension_semantics = [#tpu.dimension_semantics<parallel>, #tpu.dimension_semantics<parallel>], iteration_bounds = array<i64: 2, 1>, scalar_prefetch = 0 : i64, scratch_operands = 0 : i64, tpu.core_type = #tpu.core_type<tc>, window_params = [{transform_indices = @transform_0, window_bounds = array<i64: 64, 8>}, {transform_indices = @transform_1, window_bounds = array<i64: 8, 256>}, {transform_indices = @transform_2, window_bounds = array<i64: 64, 1>}, {transform_indices = @transform_3, window_bounds = array<i64: 1, 256>}, {transform_indices = @transform_4, window_bounds = array<i64: 64, 256>}]} {
    %c0 = arith.constant 0 : index
    %c0_0 = arith.constant 0 : index
    %0 = vector.load %arg2[%c0, %c0_0] : memref<64x8xf32, #tpu.memory_space<vmem>>, vector<64x8xf32>
    %c0_1 = arith.constant 0 : index
    %c0_2 = arith.constant 0 : index
    %1 = vector.load %arg3[%c0_1, %c0_2] : memref<8x256xf32, #tpu.memory_space<vmem>>, vector<8x256xf32>
    %cst = arith.constant dense<0.000000e+00> : vector<64x256xf32>
    %2 = tpu.matmul %0, %1, %cst {dimension_numbers = #tpu.dot_dimension_numbers<[1], [0], [0], [1], [0, 0, 1, 1], [], []>, precision = #tpu.contract_precision<fp32>} : vector<64x8xf32>, vector<8x256xf32>, vector<64x256xf32> -> vector<64x256xf32>
    %c0_3 = arith.constant 0 : index
    %c0_4 = arith.constant 0 : index
    %3 = vector.load %arg4[%c0_3, %c0_4] : memref<64x1xf32, #tpu.memory_space<vmem>>, vector<64x1xf32>
    %4 = vector.broadcast %3 : vector<64x1xf32> to vector<64x256xf32>
    %5 = arith.addf %2, %4 : vector<64x256xf32>
    %c0_5 = arith.constant 0 : index
    %c0_6 = arith.constant 0 : index
    %6 = vector.load %arg5[%c0_5, %c0_6] : memref<1x256xf32, #tpu.memory_space<vmem>>, vector<1x256xf32>
    %7 = vector.broadcast %6 : vector<1x256xf32> to vector<64x256xf32>
    %8 = arith.addf %5, %7 : vector<64x256xf32>
    %cst_7 = arith.constant 0.000000e+00 : f32
    %9 = vector.broadcast %cst_7 : f32 to vector<64x256xf32>
    %10 = arith.minimumf %8, %9 : vector<64x256xf32>
    %11 = math.exp %10 : vector<64x256xf32>
    %c0_8 = arith.constant 0 : index
    %c0_9 = arith.constant 0 : index
    %12 = vector.load %arg6[%c0_8, %c0_9] : memref<64x256xf32, #tpu.memory_space<vmem>>, vector<64x256xf32>
    tpu.vector_store %arg6[%c0_8, %c0_9], %11 {strides = array<i32>} : memref<64x256xf32, #tpu.memory_space<vmem>>, vector<64x256xf32>,
    return
  }
  func.func @transform_0(%arg0: i32, %arg1: i32) -> (i32, i32) {
    %c0_i32 = arith.constant 0 : i32
    %c0_i32_0 = arith.constant 0 : i32
    return %arg0, %c0_i32 : i32, i32
  }
  func.func @transform_1(%arg0: i32, %arg1: i32) -> (i32, i32) {
    %c0_i32 = arith.constant 0 : i32
    %c0_i32_0 = arith.constant 0 : i32
    return %c0_i32, %arg1 : i32, i32
  }
  func.func @transform_2(%arg0: i32, %arg1: i32) -> (i32, i32) {
    %c0_i32 = arith.constant 0 : i32
    %c0_i32_0 = arith.constant 0 : i32
    return %arg0, %c0_i32 : i32, i32
  }
  func.func @transform_3(%arg0: i32, %arg1: i32) -> (i32, i32) {
    %c0_i32 = arith.constant 0 : i32
    %c0_i32_0 = arith.constant 0 : i32
    return %c0_i32, %arg1 : i32, i32
  }
  func.func @transform_4(%arg0: i32, %arg1: i32) -> (i32, i32) {
    %c0_i32 = arith.constant 0 : i32
    return %arg0, %arg1 : i32, i32
  }
}

</mosaic_0001>

<llo_original>
// kernel: _forward_impl.1
$region0: #{_forward_impl.1}
  #allocation0 [shape = 'u32[]', space=smem, size = 0x4, offset = 0x4, fixed_abs, tag = 'smem constant byte address 0x4 - core index']
  #allocation1 [shape = 'u32[144,128]{1,0:T(1,128)}', space=vmem, size = 0x12000, scoped, tag = 'internal scratch']
  %s0 = inlined_call_operand.vmem [shape: f32[120,8], index: 0, kind: input, shape index: {}]
  %s1 = inlined_call_operand.vmem [shape: f32[8,200], index: 1, kind: input, shape index: {}]
  %s2 = inlined_call_operand.vmem [shape: f32[120,1], index: 2, kind: input, shape index: {}]
  %s3 = inlined_call_operand.vmem [shape: f32[1,200], index: 3, kind: input, shape index: {}]
  %s4 = inlined_call_operand.vmem [shape: f32[120,200], index: 4, kind: output, shape index: {}]
  %s5 = sld [smem:[#allocation0]]
  $region75: #{_forward_impl.1} parent=0
    _
  %s7 = ssub.s32 1, %s5
  %s8 = scalar_select 0, %s7, %s5
  $region1: #{_forward_impl.1} parent=0
    #allocation2 [shape = 'u8[131072]{0}', space=vmem, size = 0x20000, scoped, tag = 'output window, operand 0']
    loop: start=0, step=1, limit=4
    $region2: #{_forward_impl.1} parent=1 // loop_pre_header
      _
    $region3: #{_forward_impl.1} parent=1 // loop_header
      %s10 = sphi 0, %s14
      %p11 = scmp.ge.s32.totalorder %s10, 4
      %s17 = sphi 0, %s29
      %s18 = sphi 0, %s25
      %s19 = sphi 0, %s17
      %s20 = sphi 0, %s18
      %s21 = sphi 0, %s19
      %s22 = sphi 0, %s20
      %s32 = sphi 0, %s34
      %s35 = sphi 0, %s32
      %s36 = sphi 0, %s35
      %s52 = sphi 0, %s36
      %s58 = sphi 0, %s60
      %s61 = sphi 0, %s58
      %s62 = sphi 0, %s61
      %s78 = sphi 0, %s62
      %s84 = sphi 0, %s86
      %s87 = sphi 0, %s84
      %s88 = sphi 0, %s87
      %s104 = sphi 0, %s88
      %s110 = sphi 0, %s112
      %s113 = sphi 0, %s110
      %s114 = sphi 0, %s113
      %s130 = sphi 0, %s114
      %s138 = sphi 0, %s140
      %s141 = sphi 0, %s138
      %s142 = sphi 0, %s141
      %s158 = sphi 0, %s142
    $region4: #{_forward_impl.1} parent=1 // loop_header_branch
      %13 = sbr.rel (%p11) target = $region8
    $region5: #{_forward_impl.1} parent=1 // loop_body
      %s15 = ssub.s32 %s10, 1
      %s16 = ssub.s32 %s10, 2
      %s23 = sadd.s32 1, %s18
      %p24 = scmp.ge.s32.totalorder %s23, 1
      %s25 = scalar_select %p24, 0, %s23
      %s26 = sadd.s32 1, %s17
      %s27 = scalar_select %p24, %s26, %s17
      %p28 = scmp.ge.s32.totalorder %s27, 2
      %s29 = scalar_select %p28, 0, %s27
      %s30 = ssub.s32 %s17, %s29
      %p31 = scmp.eq.s32.totalorder %s30, 0
      %s33 = sadd.s32 %s32, 1
      %s34 = scalar_select %p31, %s32, %s33
      %p37 = pneg %p31
      %p38 = scmp.eq.s32.totalorder %s10, 1
      %p39 = por %p37, %p38
      %p40 = scmp.ne.s32.totalorder %s32, %s35
      %p41 = scmp.eq.s32.totalorder %s10, 0
      %p42 = por %p40, %p41
      %p43 = scmp.ne.s32.totalorder %s32, %s35
      %p44 = scmp.eq.s32.totalorder %s15, 1
      %p45 = por %p43, %p44
      %p46 = scmp.ne.s32.totalorder %s35, %s36
      %p47 = scmp.eq.s32.totalorder %s15, 0
      %p48 = por %p46, %p47
      %p49 = scmp.ne.s32.totalorder %s35, %s36
      %p50 = scmp.eq.s32.totalorder %s16, 1
      %p51 = por %p49, %p50
      %p53 = scmp.ne.s32.totalorder %s36, %s52
      %p54 = scmp.eq.s32.totalorder %s16, 0
      %p55 = por %p53, %p54
      %s56 = ssub.s32 %s18, %s25
      %p57 = scmp.eq.s32.totalorder %s56, 0
      %s59 = sadd.s32 %s58, 1
      %s60 = scalar_select %p57, %s58, %s59
      %p63 = pneg %p57
      %p64 = scmp.eq.s32.totalorder %s10, 1
      %p65 = por %p63, %p64
      %p66 = scmp.ne.s32.totalorder %s58, %s61
      %p67 = scmp.eq.s32.totalorder %s10, 0
      %p68 = por %p66, %p67
      %p69 = scmp.ne.s32.totalorder %s58, %s61
      %p70 = scmp.eq.s32.totalorder %s15, 1
      %p71 = por %p69, %p70
      %p72 = scmp.ne.s32.totalorder %s61, %s62
      %p73 = scmp.eq.s32.totalorder %s15, 0
      %p74 = por %p72, %p73
      %p75 = scmp.ne.s32.totalorder %s61, %s62
      %p76 = scmp.eq.s32.totalorder %s16, 1
      %p77 = por %p75, %p76
      %p79 = scmp.ne.s32.totalorder %s62, %s78
      %p80 = scmp.eq.s32.totalorder %s16, 0
      %p81 = por %p79, %p80
      %s82 = ssub.s32 %s17, %s29
      %p83 = scmp.eq.s32.totalorder %s82, 0
      %s85 = sadd.s32 %s84, 1
      %s86 = scalar_select %p83, %s84, %s85
      %p89 = pneg %p83
      %p90 = scmp.eq.s32.totalorder %s10, 1
      %p91 = por %p89, %p90
      %p92 = scmp.ne.s32.totalorder %s84, %s87
      %p93 = scmp.eq.s32.totalorder %s10, 0
      %p94 = por %p92, %p93
      %p95 = scmp.ne.s32.totalorder %s84, %s87
      %p96 = scmp.eq.s32.totalorder %s15, 1
      %p97 = por %p95, %p96
      %p98 = scmp.ne.s32.totalorder %s87, %s88
      %p99 = scmp.eq.s32.totalorder %s15, 0
      %p100 = por %p98, %p99
      %p101 = scmp.ne.s32.totalorder %s87, %s88
      %p102 = scmp.eq.s32.totalorder %s16, 1
      %p103 = por %p101, %p102
      %p105 = scmp.ne.s32.totalorder %s88, %s104
      %p106 = scmp.eq.s32.totalorder %s16, 0
      %p107 = por %p105, %p106
      %s108 = ssub.s32 %s18, %s25
      %p109 = scmp.eq.s32.totalorder %s108, 0
      %s111 = sadd.s32 %s110, 1
      %s112 = scalar_select %p109, %s110, %s111
      %p115 = pneg %p109
      %p116 = scmp.eq.s32.totalorder %s10, 1
      %p117 = por %p115, %p116
      %p118 = scmp.ne.s32.totalorder %s110, %s113
      %p119 = scmp.eq.s32.totalorder %s10, 0
      %p120 = por %p118, %p119
      %p121 = scmp.ne.s32.totalorder %s110, %s113
      %p122 = scmp.eq.s32.totalorder %s15, 1
      %p123 = por %p121, %p122
      %p124 = scmp.ne.s32.totalorder %s113, %s114
      %p125 = scmp.eq.s32.totalorder %s15, 0
      %p126 = por %p124, %p125
      %p127 = scmp.ne.s32.totalorder %s113, %s114
      %p128 = scmp.eq.s32.totalorder %s16, 1
      %p129 = por %p127, %p128
      %p131 = scmp.ne.s32.totalorder %s114, %s130
      %p132 = scmp.eq.s32.totalorder %s16, 0
      %p133 = por %p131, %p132
      %s134 = ssub.s32 %s17, %s29
      %s135 = ssub.s32 %s18, %s25
      %s136 = sor.u32 %s134, %s135
      %p137 = scmp.eq.s32.totalorder %s136, 0
      %s139 = sadd.s32 %s138, 1
      %s140 = scalar_select %p137, %s138, %s139
      %p143 = pneg %p137
      %p144 = scmp.eq.s32.totalorder %s10, 1
      %p145 = por %p143, %p144
      %p146 = scmp.ne.s32.totalorder %s138, %s141
      %p147 = scmp.eq.s32.totalorder %s10, 0
      %p148 = por %p146, %p147
      %p149 = scmp.ne.s32.totalorder %s138, %s141
      %p150 = scmp.eq.s32.totalorder %s15, 1
      %p151 = por %p149, %p150
      %p152 = scmp.ne.s32.totalorder %s141, %s142
      %p153 = scmp.eq.s32.totalorder %s15, 0
      %p154 = por %p152, %p153
      %p155 = scmp.ne.s32.totalorder %s141, %s142
      %p156 = scmp.eq.s32.totalorder %s16, 1
      %p157 = por %p155, %p156
      %p159 = scmp.ne.s32.totalorder %s142, %s158
      %p160 = scmp.eq.s32.totalorder %s16, 0
      %p161 = por %p159, %p160
      %p162 = scmp.le.s32.totalorder 1, %s10
      %p163 = scmp.lt.s32.totalorder %s10, 3
      %p164 = pnand %p162, %p163
      %p165 = pneg %p164
      // Predicated region
      $region9: #{_forward_impl.1} parent=5 // pred_check
        _
      $region10: #{_forward_impl.1} parent=5 // pred_check_branch
        %167 = sbr.rel (%p164) target = $region12
      $region11: #{_forward_impl.1} parent=5 // pred_region
        %s168 = ssub.s32 %s10, 1
        // Predicated region
        $region13: #{_forward_impl.1} parent=11 // pred_check
          %p169 = pneg %p74
        $region14: #{_forward_impl.1} parent=11 // pred_check_branch
          %171 = sbr.rel (%p169) target = $region16
        $region15: #{_forward_impl.1} parent=11 // pred_region
          %s172 = smul.u32 2, %s20
          %p173 = scmp.lt.s32.totalorder %s172, 1
          %s174 = scalar_select %p173, %s172, 1
          %s175 = smul.addr %s174, 8
          %s176 = scalar_lea.vmem %s1, %s175
          %s177 = smul.u32 2, %s20
        $region16: #{_forward_impl.1} parent=11 // pred_fallthru
          _
        // Predicated region
        $region17: #{_forward_impl.1} parent=11 // pred_check
          %p178 = pneg %p126
        $region18: #{_forward_impl.1} parent=11 // pred_check_branch
          %180 = sbr.rel (%p178) target = $region20
        $region19: #{_forward_impl.1} parent=11 // pred_region
          %s181 = smul.u32 2, %s20
          %p182 = scmp.lt.s32.totalorder %s181, 1
          %s183 = scalar_select %p182, %s181, 1
          %s184 = scalar_lea.vmem %s3, %s183
          %s185 = smul.u32 2, %s20
        $region20: #{_forward_impl.1} parent=11 // pred_fallthru
          _
      $region12: #{_forward_impl.1} parent=5 // pred_fallthru
        _
      %p186 = scmp.lt.s32.totalorder %s10, 2
      // Predicated region
      $region21: #{_forward_impl.1} parent=5 // pred_check
        %p187 = pneg %p186
      $region22: #{_forward_impl.1} parent=5 // pred_check_branch
        %189 = sbr.rel (%p187) target = $region24
      $region23: #{_forward_impl.1} parent=5 // pred_region
        // Predicated region
        $region25: #{_forward_impl.1} parent=23 // pred_check
          %p190 = pneg %p42
        $region26: #{_forward_impl.1} parent=23 // pred_check_branch
          %192 = sbr.rel (%p190) target = $region28
        $region27: #{_forward_impl.1} parent=23 // pred_region
          %s193 = smul.u32 8, %s17
          %s194 = ssub.s32 15, %s193
          %p195 = scmp.lt.s32.totalorder %s194, 8
          %s196 = scalar_select %p195, %s194, 8
          %s197 = smul.u32 128, %s196
          %p198 = scmp.lt.s32.totalorder %s193, 14
          %s199 = scalar_select %p198, %s193, 14
          %s200 = smul.addr %s199, 8
          %s201 = scalar_lea.vmem %s0, %s200
          %s202 = smul.u32 8, %s17
          %s203 = ssub.s32 15, %s202
          %p204 = scmp.lt.s32.totalorder %s203, 8
          %s205 = scalar_select %p204, %s203, 8
          %s206 = smul.u32 128, %s205
        $region28: #{_forward_impl.1} parent=23 // pred_fallthru
          _
        // Predicated region
        $region29: #{_forward_impl.1} parent=23 // pred_check
          %p207 = pneg %p94
        $region30: #{_forward_impl.1} parent=23 // pred_check_branch
          %209 = sbr.rel (%p207) target = $region32
        $region31: #{_forward_impl.1} parent=23 // pred_region
          %s210 = smul.u32 8, %s17
          %s211 = ssub.s32 15, %s210
          %p212 = scmp.lt.s32.totalorder %s211, 8
          %s213 = scalar_select %p212, %s211, 8
          %s214 = smul.u32 128, %s213
          %p215 = scmp.lt.s32.totalorder %s210, 14
          %s216 = scalar_select %p215, %s210, 14
          %s217 = smul.addr %s216, 8
          %s218 = scalar_lea.vmem %s2, %s217
          %s219 = smul.u32 8, %s17
          %s220 = ssub.s32 15, %s219
          %p221 = scmp.lt.s32.totalorder %s220, 8
          %s222 = scalar_select %p221, %s220, 8
          %s223 = smul.u32 128, %s222
        $region32: #{_forward_impl.1} parent=23 // pred_fallthru
          _
      $region24: #{_forward_impl.1} parent=5 // pred_fallthru
        _
      %p224 = scmp.le.s32.totalorder 1, %s10
      %p225 = scmp.lt.s32.totalorder %s10, 3
      %p226 = pnand %p224, %p225
      %p227 = pneg %p226
      // Predicated region
      $region33: #{_forward_impl.1} parent=5 // pred_check
        _
      $region34: #{_forward_impl.1} parent=5 // pred_check_branch
        %229 = sbr.rel (%p226) target = $region36
      $region35: #{_forward_impl.1} parent=5 // pred_region
        %s230 = ssub.s32 %s10, 1
        %s231 = smul.u32 8, %s19
        %s232 = ssub.s32 15, %s231
        %p233 = scmp.lt.s32.totalorder %s232, 8
        %s234 = scalar_select %p233, %s232, 8
        %s235 = smul.u32 128, %s234
        %p236 = scmp.lt.s32.totalorder %s231, 14
        %s237 = scalar_select %p236, %s231, 14
        %s238 = smul.addr %s237, 8
        %s239 = scalar_lea.vmem %s0, %s238
        %p240 = pneg %p48
        %p241 = pneg %p45
        %s242 = smul.u32 2, %s20
        %p243 = scmp.lt.s32.totalorder %s242, 1
        %s244 = scalar_select %p243, %s242, 1
        %s245 = smul.addr %s244, 8
        %s246 = scalar_lea.vmem %s1, %s245
        %p247 = pneg %p74
        %p248 = pneg %p71
        %s249 = smul.u32 8, %s19
        %s250 = ssub.s32 15, %s249
        %p251 = scmp.lt.s32.totalorder %s250, 8
        %s252 = scalar_select %p251, %s250, 8
        %s253 = smul.u32 128, %s252
        %p254 = scmp.lt.s32.totalorder %s249, 14
        %s255 = scalar_select %p254, %s249, 14
        %s256 = smul.addr %s255, 8
        %s257 = scalar_lea.vmem %s2, %s256
        %p258 = pneg %p100
        %p259 = pneg %p97
        %s260 = smul.u32 2, %s20
        %p261 = scmp.lt.s32.totalorder %s260, 1
        %s262 = scalar_select %p261, %s260, 1
        %s263 = scalar_lea.vmem %s3, %s262
        %p264 = pneg %p126
        %p265 = pneg %p123
        %p266 = pneg %p154
        %p267 = pneg %p151
        %s268 = sand.u32 %s141, 1
        %s269 = sand.u32 %s141, 1
        %s270 = smul.addr %s269, 128
        %s271 = scalar_lea.vmem [#allocation2], %s270
        %s272 = smul.u32 8, %s19
        %s273 = ssub.s32 15, %s272
        %p274 = scmp.lt.s32.totalorder %s273, 8
        %s275 = scalar_select %p274, %s273, 8
        %s276 = smul.u32 128, %s275
        %p277 = scmp.lt.s32.totalorder %s272, 14
        %s278 = scalar_select %p277, %s272, 14
        %s279 = smul.addr %s278, 8
        %s280 = scalar_lea.vmem %s0, %s279
        %s281 = smul.u32 8, %s19
        %s282 = ssub.s32 15, %s281
        %p283 = scmp.lt.s32.totalorder %s282, 8
        %s284 = scalar_select %p283, %s282, 8
        %s285 = smul.u32 128, %s284
        %s286 = smul.u32 2, %s20
        %p287 = scmp.lt.s32.totalorder %s286, 1
        %s288 = scalar_select %p287, %s286, 1
        %s289 = smul.addr %s288, 8
        %s290 = scalar_lea.vmem %s1, %s289
        %s291 = smul.u32 2, %s20
        %s292 = smul.u32 8, %s19
        %s293 = ssub.s32 15, %s292
        %p294 = scmp.lt.s32.totalorder %s293, 8
        %s295 = scalar_select %p294, %s293, 8
        %s296 = smul.u32 128, %s295
        %p297 = scmp.lt.s32.totalorder %s292, 14
        %s298 = scalar_select %p297, %s292, 14
        %s299 = smul.addr %s298, 8
        %s300 = scalar_lea.vmem %s2, %s299
        %s301 = smul.u32 8, %s19
        %s302 = ssub.s32 15, %s301
        %p303 = scmp.lt.s32.totalorder %s302, 8
        %s304 = scalar_select %p303, %s302, 8
        %s305 = smul.u32 128, %s304
        %s306 = smul.u32 2, %s20
        %p307 = scmp.lt.s32.totalorder %s306, 1
        %s308 = scalar_select %p307, %s306, 1
        %s309 = scalar_lea.vmem %s3, %s308
        %s310 = smul.u32 2, %s20
        %s311 = smul.u32 8, %s19
        %s312 = smul.u32 2, %s20
        %s313 = ssub.s32 15, %s311
        %p314 = scmp.lt.s32.totalorder %s313, 8
        %s315 = scalar_select %p314, %s313, 8
        %s316 = smul.u32 128, %s315
        %s317 = smul.u32 %s316, 2
        %v318 = vld [vmem:[%s280] sm:$0xff]
        %v319 = vld [vmem:[%s280 + $0x8] sm:$0xff]
        %v320 = vld [vmem:[%s280 + $0x10] sm:$0xff]
        %v321 = vld [vmem:[%s280 + $0x18] sm:$0xff]
        %v322 = vld [vmem:[%s280 + $0x20] sm:$0xff]
        %v323 = vld [vmem:[%s280 + $0x28] sm:$0xff]
        %v324 = vld [vmem:[%s280 + $0x30] sm:$0xff]
        %v325 = vld [vmem:[%s280 + $0x38] sm:$0xff]
        %v326 = vld [vmem:[%s290] sm:$0xff]
        %v327 = vld [vmem:[%s290 + $0x8] sm:$0xff]
        %v328 = vld [vmem:[%s300] sm:$0xff]
        %v329 = vld [vmem:[%s300 + $0x8] sm:$0xff]
        %v330 = vld [vmem:[%s300 + $0x10] sm:$0xff]
        %v331 = vld [vmem:[%s300 + $0x18] sm:$0xff]
        %v332 = vld [vmem:[%s300 + $0x20] sm:$0xff]
        %v333 = vld [vmem:[%s300 + $0x28] sm:$0xff]
        %v334 = vld [vmem:[%s300 + $0x30] sm:$0xff]
        %v335 = vld [vmem:[%s300 + $0x38] sm:$0xff]
        %337 = vset.pattern.permute.xlu0 0
        %338 = vperm.xlu0 %337, %v328
        %v339 = vpop.permute.xlu0 %338
        %342 = vset.pattern.permute.xlu0 0
        %343 = vperm.xlu0 %342, %v329
        %v344 = vpop.permute.xlu0 %343
        %347 = vset.pattern.permute.xlu0 0
        %348 = vperm.xlu0 %347, %v330
        %v349 = vpop.permute.xlu0 %348
        %352 = vset.pattern.permute.xlu0 0
        %353 = vperm.xlu0 %352, %v331
        %v354 = vpop.permute.xlu0 %353
        %357 = vset.pattern.permute.xlu0 0
        %358 = vperm.xlu0 %357, %v332
        %v359 = vpop.permute.xlu0 %358
        %362 = vset.pattern.permute.xlu0 0
        %363 = vperm.xlu0 %362, %v333
        %v364 = vpop.permute.xlu0 %363
        %367 = vset.pattern.permute.xlu0 0
        %368 = vperm.xlu0 %367, %v334
        %v369 = vpop.permute.xlu0 %368
        %372 = vset.pattern.permute.xlu0 0
        %373 = vperm.xlu0 %372, %v335
        %v374 = vpop.permute.xlu0 %373
        %vm376 = vcmask 64512
        %v378 = vsel %vm376, %v318, 0
        %v381 = vsel %vm376, %v319, 0
        %v384 = vsel %vm376, %v320, 0
        %v387 = vsel %vm376, %v321, 0
        %v390 = vsel %vm376, %v322, 0
        %v393 = vsel %vm376, %v323, 0
        %v396 = vsel %vm376, %v324, 0
        %v399 = vsel %vm376, %v325, 0
        %v401 = vand.u32 %v327, 4294901760
        %402 = vmatprep.subr.mxu0 %v401
        %v403 = vand.u32 %v326, 4294901760
        %404 = vmatpush1.msra.mxu0 %v403
        %405 = vmatprep.subr.mxu0 0.0
        %406 = vmatpush1.msra.mxu0 0.0
        %407 = vmatprep.subr.mxu0 0.0
        %408 = vmatpush1.msra.mxu0 0.0
        %409 = vmatprep.subr.mxu0 0.0
        %410 = vmatpush1.msra.mxu0 0.0
        %411 = vmatprep.subr.mxu0 0.0
        %412 = vmatpush1.msra.mxu0 0.0
        %413 = vmatprep.subr.mxu0 0.0
        %414 = vmatpush1.msra.mxu0 0.0
        %415 = vmatprep.subr.mxu0 0.0
        %416 = vmatpush1.msra.mxu0 0.0
        %417 = vmatprep.subr.mxu0 0.0
        %418 = vmatpush1.msra.mxu0 0.0
        %419 = vmatprep.subr.mxu0 0.0
        %420 = vmatpush1.msra.mxu0 0.0
        %421 = vmatprep.subr.mxu0 0.0
        %422 = vmatpush1.msra.mxu0 0.0
        %423 = vmatprep.subr.mxu0 0.0
        %424 = vmatpush1.msra.mxu0 0.0
        %425 = vmatprep.subr.mxu0 0.0
        %426 = vmatpush1.msra.mxu0 0.0
        %427 = vmatprep.subr.mxu0 0.0
        %428 = vmatpush1.msra.mxu0 0.0
        %429 = vmatprep.subr.mxu0 0.0
        %430 = vmatpush1.msra.mxu0 0.0
        %431 = vmatprep.subr.mxu0 0.0
        %432 = vmatpush1.msra.mxu0 0.0
        %433 = vmatprep.subr.mxu0 0.0
        %434 = vmatpush1.msra.mxu0 0.0
        %435 = vmatprep.subr.mxu0 0.0
        %436 = vmatpush1.msra.mxu0 0.0
        %437 = vmatprep.subr.mxu0 0.0
        %438 = vmatpush1.msra.mxu0 0.0
        %439 = vmatprep.subr.mxu0 0.0
        %440 = vmatpush1.msra.mxu0 0.0
        %441 = vmatprep.subr.mxu0 0.0
        %442 = vmatpush1.msra.mxu0 0.0
        %443 = vmatprep.subr.mxu0 0.0
        %444 = vmatpush1.msra.mxu0 0.0
        %445 = vmatprep.subr.mxu0 0.0
        %446 = vmatpush1.msra.mxu0 0.0
        %447 = vmatprep.subr.mxu0 0.0
        %448 = vmatpush1.msra.mxu0 0.0
        %449 = vmatprep.subr.mxu0 0.0
        %450 = vmatpush1.msra.mxu0 0.0
        %451 = vmatprep.subr.mxu0 0.0
        %452 = vmatpush1.msra.mxu0 0.0
        %453 = vmatprep.subr.mxu0 0.0
        %454 = vmatpush1.msra.mxu0 0.0
        %455 = vmatprep.subr.mxu0 0.0
        %456 = vmatpush1.msra.mxu0 0.0
        %457 = vmatprep.subr.mxu0 0.0
        %458 = vmatpush1.msra.mxu0 0.0
        %459 = vmatprep.subr.mxu0 0.0
        %460 = vmatpush1.msra.mxu0 0.0
        %461 = vmatprep.subr.mxu0 0.0
        %462 = vmatpush1.msra.mxu0 0.0
        %463 = vmatprep.subr.mxu0 0.0
        %464 = vmatpush1.msra.mxu0 0.0
        %465 = vmatprep.subr.mxu0 0.0
        %466 = vmatpush1.msra.mxu0 0.0
        %467 = vmatprep.mubr.f32.mxu0 0.0
        %v468 = vand.u32 %v378, 4294901760
        %v469 = vsub.f32 %v378, %v468
        %v470 = vand.u32 %v469, 4294901760
        %v471 = vsub.f32 %v469, %v470
        %v472 = vand.u32 %v471, 4294901760
        %473 = vmatmul.mubr.f32.gmra.mrb[0].mxu0 %v472
        %v474 = vpop.f32.mrb[0].mxu0
        %v475 = vadd.f32 %v339, %v474
        %v476 = vpop.f32.mrb[0].mxu0
        %v477 = vadd.f32 %v339, %v476
        %478 = vmatprep.mubr.f32.mxu0 0.0
        %v479 = vand.u32 %v381, 4294901760
        %v480 = vsub.f32 %v381, %v479
        %v481 = vand.u32 %v480, 4294901760
        %v482 = vsub.f32 %v480, %v481
        %v483 = vand.u32 %v482, 4294901760
        %484 = vmatmul.mubr.f32.gmra.mrb[0].mxu0 %v483
        %v485 = vpop.f32.mrb[0].mxu0
        %v486 = vadd.f32 %v344, %v485
        %v487 = vpop.f32.mrb[0].mxu0
        %v488 = vadd.f32 %v344, %v487
        %489 = vmatprep.mubr.f32.mxu0 0.0
        %v490 = vand.u32 %v384, 4294901760
        %v491 = vsub.f32 %v384, %v490
        %v492 = vand.u32 %v491, 4294901760
        %v493 = vsub.f32 %v491, %v492
        %v494 = vand.u32 %v493, 4294901760
        %495 = vmatmul.mubr.f32.gmra.mrb[0].mxu0 %v494
        %v496 = vpop.f32.mrb[0].mxu0
        %v497 = vadd.f32 %v349, %v496
        %v498 = vpop.f32.mrb[0].mxu0
        %v499 = vadd.f32 %v349, %v498
        %500 = vmatprep.mubr.f32.mxu0 0.0
        %v501 = vand.u32 %v387, 4294901760
        %v502 = vsub.f32 %v387, %v501
        %v503 = vand.u32 %v502, 4294901760
        %v504 = vsub.f32 %v502, %v503
        %v505 = vand.u32 %v504, 4294901760
        %506 = vmatmul.mubr.f32.gmra.mrb[0].mxu0 %v505
        %v507 = vpop.f32.mrb[0].mxu0
        %v508 = vadd.f32 %v354, %v507
        %v509 = vpop.f32.mrb[0].mxu0
        %v510 = vadd.f32 %v354, %v509
        %511 = vmatprep.mubr.f32.mxu0 0.0
        %v512 = vand.u32 %v390, 4294901760
        %v513 = vsub.f32 %v390, %v512
        %v514 = vand.u32 %v513, 4294901760
        %v515 = vsub.f32 %v513, %v514
        %v516 = vand.u32 %v515, 4294901760
        %517 = vmatmul.mubr.f32.gmra.mrb[0].mxu0 %v516
        %v518 = vpop.f32.mrb[0].mxu0
        %v519 = vadd.f32 %v359, %v518
        %v520 = vpop.f32.mrb[0].mxu0
        %v521 = vadd.f32 %v359, %v520
        %522 = vmatprep.mubr.f32.mxu0 0.0
        %v523 = vand.u32 %v393, 4294901760
        %v524 = vsub.f32 %v393, %v523
        %v525 = vand.u32 %v524, 4294901760
        %v526 = vsub.f32 %v524, %v525
        %v527 = vand.u32 %v526, 4294901760
        %528 = vmatmul.mubr.f32.gmra.mrb[0].mxu0 %v527
        %v529 = vpop.f32.mrb[0].mxu0
        %v530 = vadd.f32 %v364, %v529
        %v531 = vpop.f32.mrb[0].mxu0
        %v532 = vadd.f32 %v364, %v531
        %533 = vmatprep.mubr.f32.mxu0 0.0
        %v534 = vand.u32 %v396, 4294901760
        %v535 = vsub.f32 %v396, %v534
        %v536 = vand.u32 %v535, 4294901760
        %v537 = vsub.f32 %v535, %v536
        %v538 = vand.u32 %v537, 4294901760
        %539 = vmatmul.mubr.f32.gmra.mrb[0].mxu0 %v538
        %v540 = vpop.f32.mrb[0].mxu0
        %v541 = vadd.f32 %v369, %v540
        %v542 = vpop.f32.mrb[0].mxu0
        %v543 = vadd.f32 %v369, %v542
        %544 = vmatprep.mubr.f32.mxu0 0.0
        %v545 = vand.u32 %v399, 4294901760
        %v546 = vsub.f32 %v399, %v545
        %v547 = vand.u32 %v546, 4294901760
        %v548 = vsub.f32 %v546, %v547
        %v549 = vand.u32 %v548, 4294901760
        %550 = vmatmul.mubr.f32.gmra.mrb[0].mxu0 %v549
        %v551 = vpop.f32.mrb[0].mxu0
        %v552 = vadd.f32 %v374, %v551
        %v553 = vpop.f32.mrb[0].mxu0
        %v554 = vadd.f32 %v374, %v553
        %555 = vdwg.mxu0
        %v556 = vand.u32 %v327, 4294901760
        %v557 = vsub.f32 %v327, %v556
        %v558 = vand.u32 %v557, 4294901760
        %v559 = vsub.f32 %v557, %v558
        %v560 = vand.u32 %v559, 4294901760
        %561 = vmatprep.subr.mxu0 %v560
        %v562 = vand.u32 %v326, 4294901760
        %v563 = vsub.f32 %v326, %v562
        %v564 = vand.u32 %v563, 4294901760
        %v565 = vsub.f32 %v563, %v564
        %v566 = vand.u32 %v565, 4294901760
        %567 = vmatpush1.msra.mxu0 %v566
        %568 = vmatprep.subr.mxu0 0.0
        %569 = vmatpush1.msra.mxu0 0.0
        %570 = vmatprep.subr.mxu0 0.0
        %571 = vmatpush1.msra.mxu0 0.0
        %572 = vmatprep.subr.mxu0 0.0
        %573 = vmatpush1.msra.mxu0 0.0
        %574 = vmatprep.subr.mxu0 0.0
        %575 = vmatpush1.msra.mxu0 0.0
        %576 = vmatprep.subr.mxu0 0.0
        %577 = vmatpush1.msra.mxu0 0.0
        %578 = vmatprep.subr.mxu0 0.0
        %579 = vmatpush1.msra.mxu0 0.0
        %580 = vmatprep.subr.mxu0 0.0
        %581 = vmatpush1.msra.mxu0 0.0
        %582 = vmatprep.subr.mxu0 0.0
        %583 = vmatpush1.msra.mxu0 0.0
        %584 = vmatprep.subr.mxu0 0.0
        %585 = vmatpush1.msra.mxu0 0.0
        %586 = vmatprep.subr.mxu0 0.0
        %587 = vmatpush1.msra.mxu0 0.0
        %588 = vmatprep.subr.mxu0 0.0
        %589 = vmatpush1.msra.mxu0 0.0
        %590 = vmatprep.subr.mxu0 0.0
        %591 = vmatpush1.msra.mxu0 0.0
        %592 = vmatprep.subr.mxu0 0.0
        %593 = vmatpush1.msra.mxu0 0.0
        %594 = vmatprep.subr.mxu0 0.0
        %595 = vmatpush1.msra.mxu0 0.0
        %596 = vmatprep.subr.mxu0 0.0
        %597 = vmatpush1.msra.mxu0 0.0
        %598 = vmatprep.subr.mxu0 0.0
        %599 = vmatpush1.msra.mxu0 0.0
        %600 = vmatprep.subr.mxu0 0.0
        %601 = vmatpush1.msra.mxu0 0.0
        %602 = vmatprep.subr.mxu0 0.0
        %603 = vmatpush1.msra.mxu0 0.0
        %604 = vmatprep.subr.mxu0 0.0
        %605 = vmatpush1.msra.mxu0 0.0
        %606 = vmatprep.subr.mxu0 0.0
        %607 = vmatpush1.msra.mxu0 0.0
        %608 = vmatprep.subr.mxu0 0.0
        %609 = vmatpush1.msra.mxu0 0.0
        %610 = vmatprep.subr.mxu0 0.0
        %611 = vmatpush1.msra.mxu0 0.0
        %612 = vmatprep.subr.mxu0 0.0
        %613 = vmatpush1.msra.mxu0 0.0
        %614 = vmatprep.subr.mxu0 0.0
        %615 = vmatpush1.msra.mxu0 0.0
        %616 = vmatprep.subr.mxu0 0.0
        %617 = vmatpush1.msra.mxu0 0.0
        %618 = vmatprep.subr.mxu0 0.0
        %619 = vmatpush1.msra.mxu0 0.0
        %620 = vmatprep.subr.mxu0 0.0
        %621 = vmatpush1.msra.mxu0 0.0
        %622 = vmatprep.subr.mxu0 0.0
        %623 = vmatpush1.msra.mxu0 0.0
        %624 = vmatprep.subr.mxu0 0.0
        %625 = vmatpush1.msra.mxu0 0.0
        %626 = vmatprep.subr.mxu0 0.0
        %627 = vmatpush1.msra.mxu0 0.0
        %628 = vmatprep.subr.mxu0 0.0
        %629 = vmatpush1.msra.mxu0 0.0
        %630 = vmatprep.mubr.f32.mxu0 0.0
        %v631 = vand.u32 %v378, 4294901760
        %632 = vmatmul.mubr.f32.gmra.mrb[0].mxu0 %v631
        %v633 = vpop.f32.mrb[0].mxu0
        %v634 = vadd.f32 %v475, %v633
        %v635 = vpop.f32.mrb[0].mxu0
        %v636 = vadd.f32 %v477, %v635
        %637 = vmatprep.mubr.f32.mxu0 0.0
        %v638 = vand.u32 %v381, 4294901760
        %639 = vmatmul.mubr.f32.gmra.mrb[0].mxu0 %v638
        %v640 = vpop.f32.mrb[0].mxu0
        %v641 = vadd.f32 %v486, %v640
        %v642 = vpop.f32.mrb[0].mxu0
        %v643 = vadd.f32 %v488, %v642
        %644 = vmatprep.mubr.f32.mxu0 0.0
        %v645 = vand.u32 %v384, 4294901760
        %646 = vmatmul.mubr.f32.gmra.mrb[0].mxu0 %v645
        %v647 = vpop.f32.mrb[0].mxu0
        %v648 = vadd.f32 %v497, %v647
        %v649 = vpop.f32.mrb[0].mxu0
        %v650 = vadd.f32 %v499, %v649
        %651 = vmatprep.mubr.f32.mxu0 0.0
        %v652 = vand.u32 %v387, 4294901760
        %653 = vmatmul.mubr.f32.gmra.mrb[0].mxu0 %v652
        %v654 = vpop.f32.mrb[0].mxu0
        %v655 = vadd.f32 %v508, %v654
        %v656 = vpop.f32.mrb[0].mxu0
        %v657 = vadd.f32 %v510, %v656
        %658 = vmatprep.mubr.f32.mxu0 0.0
        %v659 = vand.u32 %v390, 4294901760
        %660 = vmatmul.mubr.f32.gmra.mrb[0].mxu0 %v659
        %v661 = vpop.f32.mrb[0].mxu0
        %v662 = vadd.f32 %v519, %v661
        %v663 = vpop.f32.mrb[0].mxu0
        %v664 = vadd.f32 %v521, %v663
        %665 = vmatprep.mubr.f32.mxu0 0.0
        %v666 = vand.u32 %v393, 4294901760
        %667 = vmatmul.mubr.f32.gmra.mrb[0].mxu0 %v666
        %v668 = vpop.f32.mrb[0].mxu0
        %v669 = vadd.f32 %v530, %v668
        %v670 = vpop.f32.mrb[0].mxu0
        %v671 = vadd.f32 %v532, %v670
        %672 = vmatprep.mubr.f32.mxu0 0.0
        %v673 = vand.u32 %v396, 4294901760
        %674 = vmatmul.mubr.f32.gmra.mrb[0].mxu0 %v673
        %v675 = vpop.f32.mrb[0].mxu0
        %v676 = vadd.f32 %v541, %v675
        %v677 = vpop.f32.mrb[0].mxu0
        %v678 = vadd.f32 %v543, %v677
        %679 = vmatprep.mubr.f32.mxu0 0.0
        %v680 = vand.u32 %v399, 4294901760
        %681 = vmatmul.mubr.f32.gmra.mrb[0].mxu0 %v680
        %v682 = vpop.f32.mrb[0].mxu0
        %v683 = vadd.f32 %v552, %v682
        %v684 = vpop.f32.mrb[0].mxu0
        %v685 = vadd.f32 %v554, %v684
        %686 = vdwg.mxu0
        %v687 = vand.u32 %v327, 4294901760
        %v688 = vsub.f32 %v327, %v687
        %689 = vmatprep.subr.mxu0 %v688
        %v690 = vand.u32 %v326, 4294901760
        %v691 = vsub.f32 %v326, %v690
        %692 = vmatpush1.msra.mxu0 %v691
        %693 = vmatprep.subr.mxu0 0.0
        %694 = vmatpush1.msra.mxu0 0.0
        %695 = vmatprep.subr.mxu0 0.0
        %696 = vmatpush1.msra.mxu0 0.0
        %697 = vmatprep.subr.mxu0 0.0
        %698 = vmatpush1.msra.mxu0 0.0
        %699 = vmatprep.subr.mxu0 0.0
        %700 = vmatpush1.msra.mxu0 0.0
        %701 = vmatprep.subr.mxu0 0.0
        %702 = vmatpush1.msra.mxu0 0.0
        %703 = vmatprep.subr.mxu0 0.0
        %704 = vmatpush1.msra.mxu0 0.0
        %705 = vmatprep.subr.mxu0 0.0
        %706 = vmatpush1.msra.mxu0 0.0
        %707 = vmatprep.subr.mxu0 0.0
        %708 = vmatpush1.msra.mxu0 0.0
        %709 = vmatprep.subr.mxu0 0.0
        %710 = vmatpush1.msra.mxu0 0.0
        %711 = vmatprep.subr.mxu0 0.0
        %712 = vmatpush1.msra.mxu0 0.0
        %713 = vmatprep.subr.mxu0 0.0
        %714 = vmatpush1.msra.mxu0 0.0
        %715 = vmatprep.subr.mxu0 0.0
        %716 = vmatpush1.msra.mxu0 0.0
        %717 = vmatprep.subr.mxu0 0.0
        %718 = vmatpush1.msra.mxu0 0.0
        %719 = vmatprep.subr.mxu0 0.0
        %720 = vmatpush1.msra.mxu0 0.0
        %721 = vmatprep.subr.mxu0 0.0
        %722 = vmatpush1.msra.mxu0 0.0
        %723 = vmatprep.subr.mxu0 0.0
        %724 = vmatpush1.msra.mxu0 0.0
        %725 = vmatprep.subr.mxu0 0.0
        %726 = vmatpush1.msra.mxu0 0.0
        %727 = vmatprep.subr.mxu0 0.0
        %728 = vmatpush1.msra.mxu0 0.0
        %729 = vmatprep.subr.mxu0 0.0
        %730 = vmatpush1.msra.mxu0 0.0
        %731 = vmatprep.subr.mxu0 0.0
        %732 = vmatpush1.msra.mxu0 0.0
        %733 = vmatprep.subr.mxu0 0.0
        %734 = vmatpush1.msra.mxu0 0.0
        %735 = vmatprep.subr.mxu0 0.0
        %736 = vmatpush1.msra.mxu0 0.0
        %737 = vmatprep.subr.mxu0 0.0
        %738 = vmatpush1.msra.mxu0 0.0
        %739 = vmatprep.subr.mxu0 0.0
        %740 = vmatpush1.msra.mxu0 0.0
        %741 = vmatprep.subr.mxu0 0.0
        %742 = vmatpush1.msra.mxu0 0.0
        %743 = vmatprep.subr.mxu0 0.0
        %744 = vmatpush1.msra.mxu0 0.0
        %745 = vmatprep.subr.mxu0 0.0
        %746 = vmatpush1.msra.mxu0 0.0
        %747 = vmatprep.subr.mxu0 0.0
        %748 = vmatpush1.msra.mxu0 0.0
        %749 = vmatprep.subr.mxu0 0.0
        %750 = vmatpush1.msra.mxu0 0.0
        %751 = vmatprep.subr.mxu0 0.0
        %752 = vmatpush1.msra.mxu0 0.0
        %753 = vmatprep.subr.mxu0 0.0
        %754 = vmatpush1.msra.mxu0 0.0
        %755 = vmatprep.mubr.f32.mxu0 0.0
        %v756 = vand.u32 %v378, 4294901760
        %v757 = vsub.f32 %v378, %v756
        %758 = vmatmul.mubr.f32.gmra.mrb[0].mxu0 %v757
        %v759 = vpop.f32.mrb[0].mxu0
        %v760 = vadd.f32 %v634, %v759
        %v761 = vpop.f32.mrb[0].mxu0
        %v762 = vadd.f32 %v636, %v761
        %763 = vmatprep.mubr.f32.mxu0 0.0
        %v764 = vand.u32 %v381, 4294901760
        %v765 = vsub.f32 %v381, %v764
        %766 = vmatmul.mubr.f32.gmra.mrb[0].mxu0 %v765
        %v767 = vpop.f32.mrb[0].mxu0
        %v768 = vadd.f32 %v641, %v767
        %v769 = vpop.f32.mrb[0].mxu0
        %v770 = vadd.f32 %v643, %v769
        %771 = vmatprep.mubr.f32.mxu0 0.0
        %v772 = vand.u32 %v384, 4294901760
        %v773 = vsub.f32 %v384, %v772
        %774 = vmatmul.mubr.f32.gmra.mrb[0].mxu0 %v773
        %v775 = vpop.f32.mrb[0].mxu0
        %v776 = vadd.f32 %v648, %v775
        %v777 = vpop.f32.mrb[0].mxu0
        %v778 = vadd.f32 %v650, %v777
        %779 = vmatprep.mubr.f32.mxu0 0.0
        %v780 = vand.u32 %v387, 4294901760
        %v781 = vsub.f32 %v387, %v780
        %782 = vmatmul.mubr.f32.gmra.mrb[0].mxu0 %v781
        %v783 = vpop.f32.mrb[0].mxu0
        %v784 = vadd.f32 %v655, %v783
        %v785 = vpop.f32.mrb[0].mxu0
        %v786 = vadd.f32 %v657, %v785
        %787 = vmatprep.mubr.f32.mxu0 0.0
        %v788 = vand.u32 %v390, 4294901760
        %v789 = vsub.f32 %v390, %v788
        %790 = vmatmul.mubr.f32.gmra.mrb[0].mxu0 %v789
        %v791 = vpop.f32.mrb[0].mxu0
        %v792 = vadd.f32 %v662, %v791
        %v793 = vpop.f32.mrb[0].mxu0
        %v794 = vadd.f32 %v664, %v793
        %795 = vmatprep.mubr.f32.mxu0 0.0
        %v796 = vand.u32 %v393, 4294901760
        %v797 = vsub.f32 %v393, %v796
        %798 = vmatmul.mubr.f32.gmra.mrb[0].mxu0 %v797
        %v799 = vpop.f32.mrb[0].mxu0
        %v800 = vadd.f32 %v669, %v799
        %v801 = vpop.f32.mrb[0].mxu0
        %v802 = vadd.f32 %v671, %v801
        %803 = vmatprep.mubr.f32.mxu0 0.0
        %v804 = vand.u32 %v396, 4294901760
        %v805 = vsub.f32 %v396, %v804
        %806 = vmatmul.mubr.f32.gmra.mrb[0].mxu0 %v805
        %v807 = vpop.f32.mrb[0].mxu0
        %v808 = vadd.f32 %v676, %v807
        %v809 = vpop.f32.mrb[0].mxu0
        %v810 = vadd.f32 %v678, %v809
        %811 = vmatprep.mubr.f32.mxu0 0.0
        %v812 = vand.u32 %v399, 4294901760
        %v813 = vsub.f32 %v399, %v812
        %814 = vmatmul.mubr.f32.gmra.mrb[0].mxu0 %v813
        %v815 = vpop.f32.mrb[0].mxu0
        %v816 = vadd.f32 %v683, %v815
        %v817 = vpop.f32.mrb[0].mxu0
        %v818 = vadd.f32 %v685, %v817
        %819 = vdwg.mxu0
        %v820 = vand.u32 %v327, 4294901760
        %821 = vmatprep.subr.mxu0 %v820
        %v822 = vand.u32 %v326, 4294901760
        %823 = vmatpush1.msra.mxu0 %v822
        %824 = vmatprep.subr.mxu0 0.0
        %825 = vmatpush1.msra.mxu0 0.0
        %826 = vmatprep.subr.mxu0 0.0
        %827 = vmatpush1.msra.mxu0 0.0
        %828 = vmatprep.subr.mxu0 0.0
        %829 = vmatpush1.msra.mxu0 0.0
        %830 = vmatprep.subr.mxu0 0.0
        %831 = vmatpush1.msra.mxu0 0.0
        %832 = vmatprep.subr.mxu0 0.0
        %833 = vmatpush1.msra.mxu0 0.0
        %834 = vmatprep.subr.mxu0 0.0
        %835 = vmatpush1.msra.mxu0 0.0
        %836 = vmatprep.subr.mxu0 0.0
        %837 = vmatpush1.msra.mxu0 0.0
        %838 = vmatprep.subr.mxu0 0.0
        %839 = vmatpush1.msra.mxu0 0.0
        %840 = vmatprep.subr.mxu0 0.0
        %841 = vmatpush1.msra.mxu0 0.0
        %842 = vmatprep.subr.mxu0 0.0
        %843 = vmatpush1.msra.mxu0 0.0
        %844 = vmatprep.subr.mxu0 0.0
        %845 = vmatpush1.msra.mxu0 0.0
        %846 = vmatprep.subr.mxu0 0.0
        %847 = vmatpush1.msra.mxu0 0.0
        %848 = vmatprep.subr.mxu0 0.0
        %849 = vmatpush1.msra.mxu0 0.0
        %850 = vmatprep.subr.mxu0 0.0
        %851 = vmatpush1.msra.mxu0 0.0
        %852 = vmatprep.subr.mxu0 0.0
        %853 = vmatpush1.msra.mxu0 0.0
        %854 = vmatprep.subr.mxu0 0.0
        %855 = vmatpush1.msra.mxu0 0.0
        %856 = vmatprep.subr.mxu0 0.0
        %857 = vmatpush1.msra.mxu0 0.0
        %858 = vmatprep.subr.mxu0 0.0
        %859 = vmatpush1.msra.mxu0 0.0
        %860 = vmatprep.subr.mxu0 0.0
        %861 = vmatpush1.msra.mxu0 0.0
        %862 = vmatprep.subr.mxu0 0.0
        %863 = vmatpush1.msra.mxu0 0.0
        %864 = vmatprep.subr.mxu0 0.0
        %865 = vmatpush1.msra.mxu0 0.0
        %866 = vmatprep.subr.mxu0 0.0
        %867 = vmatpush1.msra.mxu0 0.0
        %868 = vmatprep.subr.mxu0 0.0
        %869 = vmatpush1.msra.mxu0 0.0
        %870 = vmatprep.subr.mxu0 0.0
        %871 = vmatpush1.msra.mxu0 0.0
        %872 = vmatprep.subr.mxu0 0.0
        %873 = vmatpush1.msra.mxu0 0.0
        %874 = vmatprep.subr.mxu0 0.0
        %875 = vmatpush1.msra.mxu0 0.0
        %876 = vmatprep.subr.mxu0 0.0
        %877 = vmatpush1.msra.mxu0 0.0
        %878 = vmatprep.subr.mxu0 0.0
        %879 = vmatpush1.msra.mxu0 0.0
        %880 = vmatprep.subr.mxu0 0.0
        %881 = vmatpush1.msra.mxu0 0.0
        %882 = vmatprep.subr.mxu0 0.0
        %883 = vmatpush1.msra.mxu0 0.0
        %884 = vmatprep.subr.mxu0 0.0
        %885 = vmatpush1.msra.mxu0 0.0
        %886 = vmatprep.mubr.f32.mxu0 0.0
        %v887 = vand.u32 %v378, 4294901760
        %v888 = vsub.f32 %v378, %v887
        %v889 = vand.u32 %v888, 4294901760
        %890 = vmatmul.mubr.f32.gmra.mrb[0].mxu0 %v889
        %v891 = vpop.f32.mrb[0].mxu0
        %v892 = vadd.f32 %v760, %v891
        %v893 = vpop.f32.mrb[0].mxu0
        %v894 = vadd.f32 %v762, %v893
        %895 = vmatprep.mubr.f32.mxu0 0.0
        %v896 = vand.u32 %v381, 4294901760
        %v897 = vsub.f32 %v381, %v896
        %v898 = vand.u32 %v897, 4294901760
        %899 = vmatmul.mubr.f32.gmra.mrb[0].mxu0 %v898
        %v900 = vpop.f32.mrb[0].mxu0
        %v901 = vadd.f32 %v768, %v900
        %v902 = vpop.f32.mrb[0].mxu0
        %v903 = vadd.f32 %v770, %v902
        %904 = vmatprep.mubr.f32.mxu0 0.0
        %v905 = vand.u32 %v384, 4294901760
        %v906 = vsub.f32 %v384, %v905
        %v907 = vand.u32 %v906, 4294901760
        %908 = vmatmul.mubr.f32.gmra.mrb[0].mxu0 %v907
        %v909 = vpop.f32.mrb[0].mxu0
        %v910 = vadd.f32 %v776, %v909
        %v911 = vpop.f32.mrb[0].mxu0
        %v912 = vadd.f32 %v778, %v911
        %913 = vmatprep.mubr.f32.mxu0 0.0
        %v914 = vand.u32 %v387, 4294901760
        %v915 = vsub.f32 %v387, %v914
        %v916 = vand.u32 %v915, 4294901760
        %917 = vmatmul.mubr.f32.gmra.mrb[0].mxu0 %v916
        %v918 = vpop.f32.mrb[0].mxu0
        %v919 = vadd.f32 %v784, %v918
        %v920 = vpop.f32.mrb[0].mxu0
        %v921 = vadd.f32 %v786, %v920
        %922 = vmatprep.mubr.f32.mxu0 0.0
        %v923 = vand.u32 %v390, 4294901760
        %v924 = vsub.f32 %v390, %v923
        %v925 = vand.u32 %v924, 4294901760
        %926 = vmatmul.mubr.f32.gmra.mrb[0].mxu0 %v925
        %v927 = vpop.f32.mrb[0].mxu0
        %v928 = vadd.f32 %v792, %v927
        %v929 = vpop.f32.mrb[0].mxu0
        %v930 = vadd.f32 %v794, %v929
        %931 = vmatprep.mubr.f32.mxu0 0.0
        %v932 = vand.u32 %v393, 4294901760
        %v933 = vsub.f32 %v393, %v932
        %v934 = vand.u32 %v933, 4294901760
        %935 = vmatmul.mubr.f32.gmra.mrb[0].mxu0 %v934
        %v936 = vpop.f32.mrb[0].mxu0
        %v937 = vadd.f32 %v800, %v936
        %v938 = vpop.f32.mrb[0].mxu0
        %v939 = vadd.f32 %v802, %v938
        %940 = vmatprep.mubr.f32.mxu0 0.0
        %v941 = vand.u32 %v396, 4294901760
        %v942 = vsub.f32 %v396, %v941
        %v943 = vand.u32 %v942, 4294901760
        %944 = vmatmul.mubr.f32.gmra.mrb[0].mxu0 %v943
        %v945 = vpop.f32.mrb[0].mxu0
        %v946 = vadd.f32 %v808, %v945
        %v947 = vpop.f32.mrb[0].mxu0
        %v948 = vadd.f32 %v810, %v947
        %949 = vmatprep.mubr.f32.mxu0 0.0
        %v950 = vand.u32 %v399, 4294901760
        %v951 = vsub.f32 %v399, %v950
        %v952 = vand.u32 %v951, 4294901760
        %953 = vmatmul.mubr.f32.gmra.mrb[0].mxu0 %v952
        %v954 = vpop.f32.mrb[0].mxu0
        %v955 = vadd.f32 %v816, %v954
        %v956 = vpop.f32.mrb[0].mxu0
        %v957 = vadd.f32 %v818, %v956
        %958 = vdwg.mxu0
        %v959 = vand.u32 %v327, 4294901760
        %v960 = vsub.f32 %v327, %v959
        %v961 = vand.u32 %v960, 4294901760
        %962 = vmatprep.subr.mxu0 %v961
        %v963 = vand.u32 %v326, 4294901760
        %v964 = vsub.f32 %v326, %v963
        %v965 = vand.u32 %v964, 4294901760
        %966 = vmatpush1.msra.mxu0 %v965
        %967 = vmatprep.subr.mxu0 0.0
        %968 = vmatpush1.msra.mxu0 0.0
        %969 = vmatprep.subr.mxu0 0.0
        %970 = vmatpush1.msra.mxu0 0.0
        %971 = vmatprep.subr.mxu0 0.0
        %972 = vmatpush1.msra.mxu0 0.0
        %973 = vmatprep.subr.mxu0 0.0
        %974 = vmatpush1.msra.mxu0 0.0
        %975 = vmatprep.subr.mxu0 0.0
        %976 = vmatpush1.msra.mxu0 0.0
        %977 = vmatprep.subr.mxu0 0.0
        %978 = vmatpush1.msra.mxu0 0.0
        %979 = vmatprep.subr.mxu0 0.0
        %980 = vmatpush1.msra.mxu0 0.0
        %981 = vmatprep.subr.mxu0 0.0
        %982 = vmatpush1.msra.mxu0 0.0
        %983 = vmatprep.subr.mxu0 0.0
        %984 = vmatpush1.msra.mxu0 0.0
        %985 = vmatprep.subr.mxu0 0.0
        %986 = vmatpush1.msra.mxu0 0.0
        %987 = vmatprep.subr.mxu0 0.0
        %988 = vmatpush1.msra.mxu0 0.0
        %989 = vmatprep.subr.mxu0 0.0
        %990 = vmatpush1.msra.mxu0 0.0
        %991 = vmatprep.subr.mxu0 0.0
        %992 = vmatpush1.msra.mxu0 0.0
        %993 = vmatprep.subr.mxu0 0.0
        %994 = vmatpush1.msra.mxu0 0.0
        %995 = vmatprep.subr.mxu0 0.0
        %996 = vmatpush1.msra.mxu0 0.0
        %997 = vmatprep.subr.mxu0 0.0
        %998 = vmatpush1.msra.mxu0 0.0
        %999 = vmatprep.subr.mxu0 0.0
        %1000 = vmatpush1.msra.mxu0 0.0
        %1001 = vmatprep.subr.mxu0 0.0
        %1002 = vmatpush1.msra.mxu0 0.0
        %1003 = vmatprep.subr.mxu0 0.0
        %1004 = vmatpush1.msra.mxu0 0.0
        %1005 = vmatprep.subr.mxu0 0.0
        %1006 = vmatpush1.msra.mxu0 0.0
        %1007 = vmatprep.subr.mxu0 0.0
        %1008 = vmatpush1.msra.mxu0 0.0
        %1009 = vmatprep.subr.mxu0 0.0
        %1010 = vmatpush1.msra.mxu0 0.0
        %1011 = vmatprep.subr.mxu0 0.0
        %1012 = vmatpush1.msra.mxu0 0.0
        %1013 = vmatprep.subr.mxu0 0.0
        %1014 = vmatpush1.msra.mxu0 0.0
        %1015 = vmatprep.subr.mxu0 0.0
        %1016 = vmatpush1.msra.mxu0 0.0
        %1017 = vmatprep.subr.mxu0 0.0
        %1018 = vmatpush1.msra.mxu0 0.0
        %1019 = vmatprep.subr.mxu0 0.0
        %1020 = vmatpush1.msra.mxu0 0.0
        %1021 = vmatprep.subr.mxu0 0.0
        %1022 = vmatpush1.msra.mxu0 0.0
        %1023 = vmatprep.subr.mxu0 0.0
        %1024 = vmatpush1.msra.mxu0 0.0
        %1025 = vmatprep.subr.mxu0 0.0
        %1026 = vmatpush1.msra.mxu0 0.0
        %1027 = vmatprep.subr.mxu0 0.0
        %1028 = vmatpush1.msra.mxu0 0.0
        %1029 = vmatprep.mubr.f32.mxu0 0.0
        %v1030 = vand.u32 %v378, 4294901760
        %1031 = vmatmul.mubr.f32.gmra.mrb[0].mxu0 %v1030
        %v1032 = vpop.f32.mrb[0].mxu0
        %v1033 = vadd.f32 %v892, %v1032
        %v1034 = vpop.f32.mrb[0].mxu0
        %v1035 = vadd.f32 %v894, %v1034
        %1036 = vmatprep.mubr.f32.mxu0 0.0
        %v1037 = vand.u32 %v381, 4294901760
        %1038 = vmatmul.mubr.f32.gmra.mrb[0].mxu0 %v1037
        %v1039 = vpop.f32.mrb[0].mxu0
        %v1040 = vadd.f32 %v901, %v1039
        %v1041 = vpop.f32.mrb[0].mxu0
        %v1042 = vadd.f32 %v903, %v1041
        %1043 = vmatprep.mubr.f32.mxu0 0.0
        %v1044 = vand.u32 %v384, 4294901760
        %1045 = vmatmul.mubr.f32.gmra.mrb[0].mxu0 %v1044
        %v1046 = vpop.f32.mrb[0].mxu0
        %v1047 = vadd.f32 %v910, %v1046
        %v1048 = vpop.f32.mrb[0].mxu0
        %v1049 = vadd.f32 %v912, %v1048
        %1050 = vmatprep.mubr.f32.mxu0 0.0
        %v1051 = vand.u32 %v387, 4294901760
        %1052 = vmatmul.mubr.f32.gmra.mrb[0].mxu0 %v1051
        %v1053 = vpop.f32.mrb[0].mxu0
        %v1054 = vadd.f32 %v919, %v1053
        %v1055 = vpop.f32.mrb[0].mxu0
        %v1056 = vadd.f32 %v921, %v1055
        %1057 = vmatprep.mubr.f32.mxu0 0.0
        %v1058 = vand.u32 %v390, 4294901760
        %1059 = vmatmul.mubr.f32.gmra.mrb[0].mxu0 %v1058
        %v1060 = vpop.f32.mrb[0].mxu0
        %v1061 = vadd.f32 %v928, %v1060
        %v1062 = vpop.f32.mrb[0].mxu0
        %v1063 = vadd.f32 %v930, %v1062
        %1064 = vmatprep.mubr.f32.mxu0 0.0
        %v1065 = vand.u32 %v393, 4294901760
        %1066 = vmatmul.mubr.f32.gmra.mrb[0].mxu0 %v1065
        %v1067 = vpop.f32.mrb[0].mxu0
        %v1068 = vadd.f32 %v937, %v1067
        %v1069 = vpop.f32.mrb[0].mxu0
        %v1070 = vadd.f32 %v939, %v1069
        %1071 = vmatprep.mubr.f32.mxu0 0.0
        %v1072 = vand.u32 %v396, 4294901760
        %1073 = vmatmul.mubr.f32.gmra.mrb[0].mxu0 %v1072
        %v1074 = vpop.f32.mrb[0].mxu0
        %v1075 = vadd.f32 %v946, %v1074
        %v1076 = vpop.f32.mrb[0].mxu0
        %v1077 = vadd.f32 %v948, %v1076
        %1078 = vmatprep.mubr.f32.mxu0 0.0
        %v1079 = vand.u32 %v399, 4294901760
        %1080 = vmatmul.mubr.f32.gmra.mrb[0].mxu0 %v1079
        %v1081 = vpop.f32.mrb[0].mxu0
        %v1082 = vadd.f32 %v955, %v1081
        %v1083 = vpop.f32.mrb[0].mxu0
        %v1084 = vadd.f32 %v957, %v1083
        %1085 = vdwg.mxu0
        %v1086 = vand.u32 %v327, 4294901760
        %1087 = vmatprep.subr.mxu0 %v1086
        %v1088 = vand.u32 %v326, 4294901760
        %1089 = vmatpush1.msra.mxu0 %v1088
        %1090 = vmatprep.subr.mxu0 0.0
        %1091 = vmatpush1.msra.mxu0 0.0
        %1092 = vmatprep.subr.mxu0 0.0
        %1093 = vmatpush1.msra.mxu0 0.0
        %1094 = vmatprep.subr.mxu0 0.0
        %1095 = vmatpush1.msra.mxu0 0.0
        %1096 = vmatprep.subr.mxu0 0.0
        %1097 = vmatpush1.msra.mxu0 0.0
        %1098 = vmatprep.subr.mxu0 0.0
        %1099 = vmatpush1.msra.mxu0 0.0
        %1100 = vmatprep.subr.mxu0 0.0
        %1101 = vmatpush1.msra.mxu0 0.0
        %1102 = vmatprep.subr.mxu0 0.0
        %1103 = vmatpush1.msra.mxu0 0.0
        %1104 = vmatprep.subr.mxu0 0.0
        %1105 = vmatpush1.msra.mxu0 0.0
        %1106 = vmatprep.subr.mxu0 0.0
        %1107 = vmatpush1.msra.mxu0 0.0
        %1108 = vmatprep.subr.mxu0 0.0
        %1109 = vmatpush1.msra.mxu0 0.0
        %1110 = vmatprep.subr.mxu0 0.0
        %1111 = vmatpush1.msra.mxu0 0.0
        %1112 = vmatprep.subr.mxu0 0.0
        %1113 = vmatpush1.msra.mxu0 0.0
        %1114 = vmatprep.subr.mxu0 0.0
        %1115 = vmatpush1.msra.mxu0 0.0
        %1116 = vmatprep.subr.mxu0 0.0
        %1117 = vmatpush1.msra.mxu0 0.0
        %1118 = vmatprep.subr.mxu0 0.0
        %1119 = vmatpush1.msra.mxu0 0.0
        %1120 = vmatprep.subr.mxu0 0.0
        %1121 = vmatpush1.msra.mxu0 0.0
        %1122 = vmatprep.subr.mxu0 0.0
        %1123 = vmatpush1.msra.mxu0 0.0
        %1124 = vmatprep.subr.mxu0 0.0
        %1125 = vmatpush1.msra.mxu0 0.0
        %1126 = vmatprep.subr.mxu0 0.0
        %1127 = vmatpush1.msra.mxu0 0.0
        %1128 = vmatprep.subr.mxu0 0.0
        %1129 = vmatpush1.msra.mxu0 0.0
        %1130 = vmatprep.subr.mxu0 0.0
        %1131 = vmatpush1.msra.mxu0 0.0
        %1132 = vmatprep.subr.mxu0 0.0
        %1133 = vmatpush1.msra.mxu0 0.0
        %1134 = vmatprep.subr.mxu0 0.0
        %1135 = vmatpush1.msra.mxu0 0.0
        %1136 = vmatprep.subr.mxu0 0.0
        %1137 = vmatpush1.msra.mxu0 0.0
        %1138 = vmatprep.subr.mxu0 0.0
        %1139 = vmatpush1.msra.mxu0 0.0
        %1140 = vmatprep.subr.mxu0 0.0
        %1141 = vmatpush1.msra.mxu0 0.0
        %1142 = vmatprep.subr.mxu0 0.0
        %1143 = vmatpush1.msra.mxu0 0.0
        %1144 = vmatprep.subr.mxu0 0.0
        %1145 = vmatpush1.msra.mxu0 0.0
        %1146 = vmatprep.subr.mxu0 0.0
        %1147 = vmatpush1.msra.mxu0 0.0
        %1148 = vmatprep.subr.mxu0 0.0
        %1149 = vmatpush1.msra.mxu0 0.0
        %1150 = vmatprep.subr.mxu0 0.0
        %1151 = vmatpush1.msra.mxu0 0.0
        %1152 = vmatprep.mubr.f32.mxu0 0.0
        %v1153 = vand.u32 %v378, 4294901760
        %1154 = vmatmul.mubr.f32.gmra.mrb[0].mxu0 %v1153
        %v1155 = vpop.f32.mrb[0].mxu0
        %v1156 = vadd.f32 %v1033, %v1155
        %v1157 = vpop.f32.mrb[0].mxu0
        %v1158 = vadd.f32 %v1035, %v1157
        %1159 = vmatprep.mubr.f32.mxu0 0.0
        %v1160 = vand.u32 %v381, 4294901760
        %1161 = vmatmul.mubr.f32.gmra.mrb[0].mxu0 %v1160
        %v1162 = vpop.f32.mrb[0].mxu0
        %v1163 = vadd.f32 %v1040, %v1162
        %v1164 = vpop.f32.mrb[0].mxu0
        %v1165 = vadd.f32 %v1042, %v1164
        %1166 = vmatprep.mubr.f32.mxu0 0.0
        %v1167 = vand.u32 %v384, 4294901760
        %1168 = vmatmul.mubr.f32.gmra.mrb[0].mxu0 %v1167
        %v1169 = vpop.f32.mrb[0].mxu0
        %v1170 = vadd.f32 %v1047, %v1169
        %v1171 = vpop.f32.mrb[0].mxu0
        %v1172 = vadd.f32 %v1049, %v1171
        %1173 = vmatprep.mubr.f32.mxu0 0.0
        %v1174 = vand.u32 %v387, 4294901760
        %1175 = vmatmul.mubr.f32.gmra.mrb[0].mxu0 %v1174
        %v1176 = vpop.f32.mrb[0].mxu0
        %v1177 = vadd.f32 %v1054, %v1176
        %v1178 = vpop.f32.mrb[0].mxu0
        %v1179 = vadd.f32 %v1056, %v1178
        %1180 = vmatprep.mubr.f32.mxu0 0.0
        %v1181 = vand.u32 %v390, 4294901760
        %1182 = vmatmul.mubr.f32.gmra.mrb[0].mxu0 %v1181
        %v1183 = vpop.f32.mrb[0].mxu0
        %v1184 = vadd.f32 %v1061, %v1183
        %v1185 = vpop.f32.mrb[0].mxu0
        %v1186 = vadd.f32 %v1063, %v1185
        %1187 = vmatprep.mubr.f32.mxu0 0.0
        %v1188 = vand.u32 %v393, 4294901760
        %1189 = vmatmul.mubr.f32.gmra.mrb[0].mxu0 %v1188
        %v1190 = vpop.f32.mrb[0].mxu0
        %v1191 = vadd.f32 %v1068, %v1190
        %v1192 = vpop.f32.mrb[0].mxu0
        %v1193 = vadd.f32 %v1070, %v1192
        %1194 = vmatprep.mubr.f32.mxu0 0.0
        %v1195 = vand.u32 %v396, 4294901760
        %1196 = vmatmul.mubr.f32.gmra.mrb[0].mxu0 %v1195
        %v1197 = vpop.f32.mrb[0].mxu0
        %v1198 = vadd.f32 %v1075, %v1197
        %v1199 = vpop.f32.mrb[0].mxu0
        %v1200 = vadd.f32 %v1077, %v1199
        %1201 = vmatprep.mubr.f32.mxu0 0.0
        %v1202 = vand.u32 %v399, 4294901760
        %1203 = vmatmul.mubr.f32.gmra.mrb[0].mxu0 %v1202
        %v1204 = vpop.f32.mrb[0].mxu0
        %v1205 = vadd.f32 %v1082, %v1204
        %v1206 = vpop.f32.mrb[0].mxu0
        %v1207 = vadd.f32 %v1084, %v1206
        %1208 = vdwg.mxu0
        %v1209 = vld [vmem:[%s309] sm:$0x3]
        %v1211 = vlaneseq
        %v1212 = vshrl.u32 %v1211, 7
        %v1213 = vsub.s32 0, %v1212
        %v1214 = vrot.slane %v1209, %v1213
        %v1215 = vlaneseq
        %v1216 = vshrl.u32 %v1215, 7
        %v1217 = vsub.s32 1, %v1216
        %v1218 = vrot.slane %v1209, %v1217
        %v1221 = vadd.f32 %v1156, %v1214
        %v1222 = vadd.f32 %v1158, %v1218
        %v1223 = vadd.f32 %v1163, %v1214
        %v1224 = vadd.f32 %v1165, %v1218
        %v1225 = vadd.f32 %v1170, %v1214
        %v1226 = vadd.f32 %v1172, %v1218
        %v1227 = vadd.f32 %v1177, %v1214
        %v1228 = vadd.f32 %v1179, %v1218
        %v1229 = vadd.f32 %v1184, %v1214
        %v1230 = vadd.f32 %v1186, %v1218
        %v1231 = vadd.f32 %v1191, %v1214
        %v1232 = vadd.f32 %v1193, %v1218
        %v1233 = vadd.f32 %v1198, %v1214
        %v1234 = vadd.f32 %v1200, %v1218
        %v1235 = vadd.f32 %v1205, %v1214
        %v1236 = vadd.f32 %v1207, %v1218
        %v1237 = vmin.f32 %v1221, 0.0
        %v1238 = vmin.f32 %v1222, 0.0
        %v1239 = vmin.f32 %v1223, 0.0
        %v1240 = vmin.f32 %v1224, 0.0
        %v1241 = vmin.f32 %v1225, 0.0
        %v1242 = vmin.f32 %v1226, 0.0
        %v1243 = vmin.f32 %v1227, 0.0
        %v1244 = vmin.f32 %v1228, 0.0
        %v1245 = vmin.f32 %v1229, 0.0
        %v1246 = vmin.f32 %v1230, 0.0
        %v1247 = vmin.f32 %v1231, 0.0
        %v1248 = vmin.f32 %v1232, 0.0
        %v1249 = vmin.f32 %v1233, 0.0
        %v1250 = vmin.f32 %v1234, 0.0
        %v1251 = vmin.f32 %v1235, 0.0
        %v1252 = vmin.f32 %v1236, 0.0
        %v1253 = vmul.f32 %v1237, 1.442695
        %v1254 = vpow.pop %v1253
        %v1255 = vmul.f32 %v1238, 1.442695
        %v1256 = vpow.pop %v1255
        %v1257 = vmul.f32 %v1239, 1.442695
        %v1258 = vpow.pop %v1257
        %v1259 = vmul.f32 %v1240, 1.442695
        %v1260 = vpow.pop %v1259
        %v1261 = vmul.f32 %v1241, 1.442695
        %v1262 = vpow.pop %v1261
        %v1263 = vmul.f32 %v1242, 1.442695
        %v1264 = vpow.pop %v1263
        %v1265 = vmul.f32 %v1243, 1.442695
        %v1266 = vpow.pop %v1265
        %v1267 = vmul.f32 %v1244, 1.442695
        %v1268 = vpow.pop %v1267
        %v1269 = vmul.f32 %v1245, 1.442695
        %v1270 = vpow.pop %v1269
        %v1271 = vmul.f32 %v1246, 1.442695
        %v1272 = vpow.pop %v1271
        %v1273 = vmul.f32 %v1247, 1.442695
        %v1274 = vpow.pop %v1273
        %v1275 = vmul.f32 %v1248, 1.442695
        %v1276 = vpow.pop %v1275
        %v1277 = vmul.f32 %v1249, 1.442695
        %v1278 = vpow.pop %v1277
        %v1279 = vmul.f32 %v1250, 1.442695
        %v1280 = vpow.pop %v1279
        %v1281 = vmul.f32 %v1251, 1.442695
        %v1282 = vpow.pop %v1281
        %v1283 = vmul.f32 %v1252, 1.442695
        %v1284 = vpow.pop %v1283
        %1285 = vst [vmem:[%s271] sm:$0xff] %v1254
        %1286 = vst [vmem:[%s271 + $0x8] sm:$0xff] %v1256
        %1287 = vst [vmem:[%s271 + $0x10] sm:$0xff] %v1258
        %1288 = vst [vmem:[%s271 + $0x18] sm:$0xff] %v1260
        %1289 = vst [vmem:[%s271 + $0x20] sm:$0xff] %v1262
        %1290 = vst [vmem:[%s271 + $0x28] sm:$0xff] %v1264
        %1291 = vst [vmem:[%s271 + $0x30] sm:$0xff] %v1266
        %1292 = vst [vmem:[%s271 + $0x38] sm:$0xff] %v1268
        %1293 = vst [vmem:[%s271 + $0x40] sm:$0xff] %v1270
        %1294 = vst [vmem:[%s271 + $0x48] sm:$0xff] %v1272
        %1295 = vst [vmem:[%s271 + $0x50] sm:$0xff] %v1274
        %1296 = vst [vmem:[%s271 + $0x58] sm:$0xff] %v1276
        %1297 = vst [vmem:[%s271 + $0x60] sm:$0xff] %v1278
        %1298 = vst [vmem:[%s271 + $0x68] sm:$0xff] %v1280
        %1299 = vst [vmem:[%s271 + $0x70] sm:$0xff] %v1282
        %1300 = vst [vmem:[%s271 + $0x78] sm:$0xff] %v1284
        %s1301 = sand.u32 %s141, 1
        %s1302 = sand.u32 %s141, 1
        %s1303 = smul.addr %s1302, 128
        %s1304 = scalar_lea.vmem [#allocation2], %s1303
        // Predicated region
        $region37: #{_forward_impl.1} parent=35 // pred_check
          %p1305 = pneg %p151
        $region38: #{_forward_impl.1} parent=35 // pred_check_branch
          %1307 = sbr.rel (%p1305) target = $region40
        $region39: #{_forward_impl.1} parent=35 // pred_region
          %s1308 = smul.u32 8, %s19
          %s1309 = smul.u32 2, %s20
          %s1310 = ssub.s32 15, %s1308
          %p1311 = scmp.lt.s32.totalorder %s1310, 8
          %s1312 = scalar_select %p1311, %s1310, 8
          %s1313 = smul.u32 128, %s1312
          %s1314 = smul.u32 %s1313, 2
          %p1315 = scmp.ne.s32.totalorder 0, %s1314
          %s1316 = smul.addr %s1308, 2
          %s1317 = sadd.s32 %s1309, %s1316
          %s1318 = smul.addr %s1317, 8
          %s1319 = scalar_lea.vmem %s4, %s1318
          // Predicated region
          $region41: #{_forward_impl.1} parent=39 // pred_check
            %p1320 = pneg %p1315
          $region42: #{_forward_impl.1} parent=39 // pred_check_branch
            %1322 = sbr.rel (%p1320) target = $region44
          $region43: #{_forward_impl.1} parent=39 // pred_region
            // Predicated region
            $region45: #{_forward_impl.1} parent=43 // pred_check
              _
            $region46: #{_forward_impl.1} parent=43 // pred_check_branch
              %1324 = sbr.rel (0) target = $region48
            $region47: #{_forward_impl.1} parent=43 // pred_region
              %s1325 = sshrl.u32 %s1312, 3
              // While loop
              $region49: #{_forward_impl.1} parent=47 // loop_pre_header
                _
              $region50: #{_forward_impl.1} parent=47 // loop_header
                %s1327 = sphi 0, %s1329
                %p1328 = scmp.ge.s32.totalorder %s1327, %s1325
                %s1332 = sphi 0, %s1369
                %s1333 = sphi %s1304, %s1372
                %s1334 = sphi %s1319, %s1373
              $region51: #{_forward_impl.1} parent=47 // loop_header_branch
                %1331 = sbr.rel (%p1328) target = $region55
              $region52: #{_forward_impl.1} parent=47 // loop_body
                %v1335 = vld [vmem:[%s1333] sm:$0xff]
                %1336 = vst [vmem:[%s1334] sm:$0xff] %v1335
                %v1337 = vld [vmem:[%s1333 + $0x10] sm:$0xff]
                %1338 = vst [vmem:[%s1334 + $0x10] sm:$0xff] %v1337
                %v1339 = vld [vmem:[%s1333 + $0x20] sm:$0xff]
                %1340 = vst [vmem:[%s1334 + $0x20] sm:$0xff] %v1339
                %v1341 = vld [vmem:[%s1333 + $0x30] sm:$0xff]
                %1342 = vst [vmem:[%s1334 + $0x30] sm:$0xff] %v1341
                %v1343 = vld [vmem:[%s1333 + $0x40] sm:$0xff]
                %1344 = vst [vmem:[%s1334 + $0x40] sm:$0xff] %v1343
                %v1345 = vld [vmem:[%s1333 + $0x50] sm:$0xff]
                %1346 = vst [vmem:[%s1334 + $0x50] sm:$0xff] %v1345
                %v1347 = vld [vmem:[%s1333 + $0x60] sm:$0xff]
                %1348 = vst [vmem:[%s1334 + $0x60] sm:$0xff] %v1347
                %v1349 = vld [vmem:[%s1333 + $0x70] sm:$0xff]
                %1350 = vst [vmem:[%s1334 + $0x70] sm:$0xff] %v1349
                %v1351 = vld [vmem:[%s1333 + $0x8] sm:$0xff]
                %1352 = vst [vmem:[%s1334 + $0x8] sm:$0xff] %v1351
                %v1353 = vld [vmem:[%s1333 + $0x18] sm:$0xff]
                %1354 = vst [vmem:[%s1334 + $0x18] sm:$0xff] %v1353
                %v1355 = vld [vmem:[%s1333 + $0x28] sm:$0xff]
                %1356 = vst [vmem:[%s1334 + $0x28] sm:$0xff] %v1355
                %v1357 = vld [vmem:[%s1333 + $0x38] sm:$0xff]
                %1358 = vst [vmem:[%s1334 + $0x38] sm:$0xff] %v1357
                %v1359 = vld [vmem:[%s1333 + $0x48] sm:$0xff]
                %1360 = vst [vmem:[%s1334 + $0x48] sm:$0xff] %v1359
                %v1361 = vld [vmem:[%s1333 + $0x58] sm:$0xff]
                %1362 = vst [vmem:[%s1334 + $0x58] sm:$0xff] %v1361
                %v1363 = vld [vmem:[%s1333 + $0x68] sm:$0xff]
                %1364 = vst [vmem:[%s1334 + $0x68] sm:$0xff] %v1363
                %v1365 = vld [vmem:[%s1333 + $0x78] sm:$0xff]
                %1366 = vst [vmem:[%s1334 + $0x78] sm:$0xff] %v1365
                %s1367 = sadd.s32 1, %s1332
                %p1368 = scmp.ge.s32.totalorder %s1367, %s1325
                %s1369 = scalar_select %p1368, 0, %s1367
                %s1370 = smul.u32 %s1369, 128
                %s1371 = smul.u32 %s1369, 128
                %s1372 = scalar_lea.vmem %s1304, %s1370 [#allocation2]
                %s1373 = scalar_lea.vmem %s1319, %s1371
              $region53: #{_forward_impl.1} parent=47 // loop_footer
                %s1329 = sadd.s32 %s1327, 1
              $region54: #{_forward_impl.1} parent=47 // loop_footer_branch
                %1326 = sbr.rel target = $region50
              $region55: #{_forward_impl.1} parent=47 // loop_exit
                _
              %s1374 = sshrl.u32 %s1312, 3
              %s1375 = sand.u32 %s1312, 7
              %s1376 = smul.u32 %s1374, 8
              %s1377 = smul.u32 16, %s1376
              %s1378 = scalar_lea.vmem %s1304, %s1377 [#allocation2]
              %s1379 = smul.u32 16, %s1376
              %s1380 = scalar_lea.vmem %s1319, %s1379
              // While loop
              $region56: #{_forward_impl.1} parent=47 // loop_pre_header
                _
              $region57: #{_forward_impl.1} parent=47 // loop_header
                %s1382 = sphi 0, %s1384
                %p1383 = scmp.ge.s32.totalorder %s1382, %s1375
                %s1387 = sphi 0, %s1396
                %s1388 = sphi %s1378, %s1399
                %s1389 = sphi %s1380, %s1400
              $region58: #{_forward_impl.1} parent=47 // loop_header_branch
                %1386 = sbr.rel (%p1383) target = $region62
              $region59: #{_forward_impl.1} parent=47 // loop_body
                %v1390 = vld [vmem:[%s1388] sm:$0xff]
                %1391 = vst [vmem:[%s1389] sm:$0xff] %v1390
                %v1392 = vld [vmem:[%s1388 + $0x8] sm:$0xff]
                %1393 = vst [vmem:[%s1389 + $0x8] sm:$0xff] %v1392
                %s1394 = sadd.s32 1, %s1387
                %p1395 = scmp.ge.s32.totalorder %s1394, %s1375
                %s1396 = scalar_select %p1395, 0, %s1394
                %s1397 = smul.u32 %s1396, 16
                %s1398 = smul.u32 %s1396, 16
                %s1399 = scalar_lea.vmem %s1378, %s1397 [#allocation2]
                %s1400 = scalar_lea.vmem %s1380, %s1398
              $region60: #{_forward_impl.1} parent=47 // loop_footer
                %s1384 = sadd.s32 %s1382, 1
              $region61: #{_forward_impl.1} parent=47 // loop_footer_branch
                %1381 = sbr.rel target = $region57
              $region62: #{_forward_impl.1} parent=47 // loop_exit
                _
            $region48: #{_forward_impl.1} parent=43 // pred_fallthru
              _
            // Predicated region
            $region63: #{_forward_impl.1} parent=43 // pred_check
              _
            $region64: #{_forward_impl.1} parent=43 // pred_check_branch
              %1402 = sbr.rel target = $region66
            $region65: #{_forward_impl.1} parent=43 // pred_region
              _
            $region66: #{_forward_impl.1} parent=43 // pred_fallthru
              _
          $region44: #{_forward_impl.1} parent=39 // pred_fallthru
            _
          %1403 = vnop
        $region40: #{_forward_impl.1} parent=35 // pred_fallthru
          _
      $region36: #{_forward_impl.1} parent=5 // pred_fallthru
        _
      %p1404 = scmp.le.s32.totalorder 2, %s10
      // Predicated region
      $region67: #{_forward_impl.1} parent=5 // pred_check
        %p1405 = pneg %p1404
      $region68: #{_forward_impl.1} parent=5 // pred_check_branch
        %1407 = sbr.rel (%p1405) target = $region70
      $region69: #{_forward_impl.1} parent=5 // pred_region
        %s1408 = ssub.s32 %s10, 2
        // Predicated region
        $region71: #{_forward_impl.1} parent=69 // pred_check
          %p1409 = pneg %p157
        $region72: #{_forward_impl.1} parent=69 // pred_check_branch
          %1411 = sbr.rel (%p1409) target = $region74
        $region73: #{_forward_impl.1} parent=69 // pred_region
          %s1412 = sand.u32 %s142, 1
          %s1413 = sand.u32 %s142, 1
          %s1414 = smul.addr %s1413, 128
          %s1415 = scalar_lea.vmem [#allocation2], %s1414
        $region74: #{_forward_impl.1} parent=69 // pred_fallthru
          _
      $region70: #{_forward_impl.1} parent=5 // pred_fallthru
        _
    $region6: #{_forward_impl.1} parent=1 // loop_footer
      %s14 = sadd.s32 1, %s10
    $region7: #{_forward_impl.1} parent=1 // loop_footer_branch
      %9 = sbr.rel target = $region3
    $region8: #{_forward_impl.1} parent=1 // loop_exit
      _

</llo_original>
